<compile_context>
chip_gen: v6e
topology: v6e:2x2x1
jax: 0.10.0
libtpu: 0.0.40
codegen_flags: <defaults>
</compile_context>

<pallas_src>
import jax
import jax.numpy as jnp
from jax.experimental import pallas as pl
from jax.experimental.pallas import tpu as pltpu

HIDDEN = 128   # fc1 width (fixed by the module)
LANE = 128     # TPU lane width


def _round_up(x, m):
    return ((x + m - 1) // m) * m


def qnet_kernel(xt_ref, w1_ref, w2_ref, bias_ref, o_ref):
    out_pad = o_ref.shape[0]
    # Cast x f32 -> bf16 in-kernel (VPU slot is idle; avoids a wrapper pass).
    x_bf = xt_ref[...].astype(jnp.bfloat16)                      # (in, tm)
    # fc1 (transposed): (128, in) @ (in, tm) on the MXU, f32 accumulation.
    h = jnp.dot(w1_ref[...], x_bf, preferred_element_type=jnp.float32)
    h = h + bias_ref[:, 0:1]                                     # b1, f32 add
    h = jnp.maximum(h, 0.0)                                      # ReLU in f32
    # fc2 (transposed): (out_pad, 128) @ (128, tm) -> dense (out_pad, tm).
    y = jnp.dot(w2_ref[...], h.astype(jnp.bfloat16),
                preferred_element_type=jnp.float32)
    y = y + bias_ref[0:out_pad, 1:2]                             # b2 (padded w/ 0)
    o_ref[...] = y.astype(o_ref.dtype)


def pack_qnet_params(w1, b1, w2, b2, param_dtype=jnp.bfloat16):
    """Pack PyTorch-layout params (w1:(128,in), w2:(out,128)) for the kernel:
    bf16 weights, w2/b2 zero-padded to out_pad8 rows, b1/b2 merged into one
    (128, 2) f32 bias buffer (col 0 = b1, col 1 = padded b2)."""
    hidden, in_size = w1.shape
    out_size, hidden2 = w2.shape
    assert hidden == HIDDEN and hidden2 == HIDDEN
    assert out_size <= LANE, "output_size > 128 not supported by this packing"
    out_pad = max(8, _round_up(out_size, 8))
    w1p = w1.astype(param_dtype)
    w2p = jnp.zeros((out_pad, HIDDEN), param_dtype)
    w2p = w2p.at[:out_size, :].set(w2.astype(param_dtype))
    bias = jnp.zeros((HIDDEN, 2), jnp.float32)
    bias = bias.at[:, 0].set(b1.reshape(-1).astype(jnp.float32))
    bias = bias.at[:out_size, 1].set(b2.reshape(-1).astype(jnp.float32))
    return w1p, w2p, bias, out_size


def _choose_tile(batch, cap):
    """Pick (tm, padded_batch). Small batches: one full-dim tile, no padding.
    Large batches: lane tiles (multiple of 128), aiming for >= 2 tiles so both
    v7x TensorCores get work; padded rows cost ~100 B each in this layout."""
    if batch <= 256:
        return batch, batch
    tm = min(int(cap), _round_up((batch + 1) // 2, 128))
    tm = max(tm, 128)
    padded_batch = _round_up(batch, tm)
    return tm, padded_batch


def qnet_forward(x, w1p, w2p, bias, out_size, *, tile_m=512):
    """x: (B, input_size) f32; returns (B, output_size) f32."""
    batch, in_size = x.shape
    out_pad = w2p.shape[0]
    tm, padded_batch = _choose_tile(batch, tile_m)
    grid_m = padded_batch // tm

    # Layout plumbing only (x stays f32; the bf16 cast happens in-kernel).
    x_t = x.T                                         # (in, B)
    if padded_batch != batch:
        x_t = jnp.pad(x_t, ((0, 0), (0, padded_batch - batch)))

    flops = 2 * padded_batch * (in_size * HIDDEN + HIDDEN * out_pad)
    bytes_accessed = (x_t.size * 4 + w1p.size * 2 + w2p.size * 2
                      + bias.size * 4 + out_pad * padded_batch * 4)

    out_t = pl.pallas_call(
        qnet_kernel,
        out_shape=jax.ShapeDtypeStruct((out_pad, padded_batch), jnp.float32),
        grid=(grid_m,),
        in_specs=[
            pl.BlockSpec((in_size, tm), lambda i: (0, i)),       # x_t tile (f32)
            pl.BlockSpec((HIDDEN, in_size), lambda i: (0, 0)),   # w1 resident
            pl.BlockSpec((out_pad, HIDDEN), lambda i: (0, 0)),   # w2 resident
            pl.BlockSpec((HIDDEN, 2), lambda i: (0, 0)),         # merged biases
        ],
        out_specs=pl.BlockSpec((out_pad, tm), lambda i: (0, i)),
        compiler_params=pltpu.CompilerParams(
            dimension_semantics=("parallel",)),
        cost_estimate=pl.CostEstimate(flops=flops, transcendentals=0,
                                      bytes_accessed=bytes_accessed),
    )(x_t, w1p, w2p, bias)

    return out_t[:out_size, :batch].T


def qnet_reference(x, w1, b1, w2, b2, param_dtype=jnp.bfloat16):
    """Pure-JAX reference replicating the kernel's casts (bf16 MXU operands,
    f32 accumulation / elementwise).  w1:(128,in), w2:(out,128) torch layout."""
    xb = x.astype(param_dtype)
    h = jnp.dot(xb, w1.T.astype(param_dtype),
                preferred_element_type=jnp.float32) + b1.reshape(1, -1)
    h = jnp.maximum(h, 0.0)
    y = jnp.dot(h.astype(param_dtype), w2.T.astype(param_dtype),
                preferred_element_type=jnp.float32) + b2.reshape(1, -1)
    return y


def init_qnet_params(key, input_size, output_size, hidden=HIDDEN,
                     dtype=jnp.float32):
    """Deterministic init mimicking torch.nn.Linear (uniform +/- 1/sqrt(fan_in)),
    stored in PyTorch layout: w1 (hidden, in), w2 (out, hidden)."""
    k1, k2, k3, k4 = jax.random.split(key, 4)
    bound1 = 1.0 / (input_size ** 0.5)
    bound2 = 1.0 / (hidden ** 0.5)
    w1 = jax.random.uniform(k1, (hidden, input_size), dtype, -bound1, bound1)
    b1 = jax.random.uniform(k2, (hidden,), dtype, -bound1, bound1)
    w2 = jax.random.uniform(k3, (output_size, hidden), dtype, -bound2, bound2)
    b2 = jax.random.uniform(k4, (output_size,), dtype, -bound2, bound2)
    return w1, b1, w2, b2


if __name__ == "__main__":
    input_size = 16     # small state vector
    output_size = 4     # number of discrete actions

    key = jax.random.PRNGKey(0)
    kx, kx2, kp = jax.random.split(key, 3)

    w1, b1, w2, b2 = init_qnet_params(kp, input_size, output_size)
    w1p, w2p, bias, osz = pack_qnet_params(w1, b1, w2, b2)

    # Case 1: tiny RL-style batch (single full-dim tile, no padding).
    batch = 8
    x = jax.random.normal(kx, (batch, input_size), jnp.float32)
    out = jax.block_until_ready(qnet_forward(x, w1p, w2p, bias, osz))
    ref = qnet_reference(x, w1, b1, w2, b2)
    assert out.shape == (batch, output_size)
    assert jnp.allclose(out, ref, atol=2e-3, rtol=2e-3)

    # Case 2: awkward replay-buffer batch exercising the tiled "parallel"
    # grid (tm=256 -> grid=(2,), lane-padded columns sliced off).
    big_batch = 300
    xb = jax.random.normal(kx2, (big_batch, input_size), jnp.float32)
    out_b = jax.block_until_ready(qnet_forward(xb, w1p, w2p, bias, osz))
    ref_b = qnet_reference(xb, w1, b1, w2, b2)
    assert out_b.shape == (big_batch, output_size)
    assert jnp.allclose(out_b, ref_b, atol=2e-3, rtol=2e-3)

    print("KERNEL_OK")
</pallas_src>

<mosaic_0001>
module attributes {stable_mosaic.version = 11 : i64} {
  func.func @qnet_kernel(%arg0: i32, %arg1: memref<16x8xf32, #tpu.memory_space<vmem>>, %arg2: memref<128x16xbf16, #tpu.memory_space<vmem>>, %arg3: memref<8x128xbf16, #tpu.memory_space<vmem>>, %arg4: memref<128x2xf32, #tpu.memory_space<vmem>>, %arg5: memref<8x8xf32, #tpu.memory_space<vmem>>) attributes {dimension_semantics = [#tpu.dimension_semantics<parallel>], iteration_bounds = array<i64: 1>, scalar_prefetch = 0 : i64, scratch_operands = 0 : i64, tpu.core_type = #tpu.core_type<tc>, window_params = [{transform_indices = @transform_0, window_bounds = array<i64: 16, 8>}, {pipeline_mode = #tpu.pipeline_mode<synchronous>, transform_indices = @transform_1, window_bounds = array<i64: 128, 16>}, {pipeline_mode = #tpu.pipeline_mode<synchronous>, transform_indices = @transform_2, window_bounds = array<i64: 8, 128>}, {pipeline_mode = #tpu.pipeline_mode<synchronous>, transform_indices = @transform_3, window_bounds = array<i64: 128, 2>}, {transform_indices = @transform_4, window_bounds = array<i64: 8, 8>}]} {
    %c0 = arith.constant 0 : index
    %c0_0 = arith.constant 0 : index
    %0 = vector.load %arg1[%c0, %c0_0] : memref<16x8xf32, #tpu.memory_space<vmem>>, vector<16x8xf32>
    %1 = arith.truncf %0 : vector<16x8xf32> to vector<16x8xbf16>
    %c0_1 = arith.constant 0 : index
    %c0_2 = arith.constant 0 : index
    %2 = vector.load %arg2[%c0_1, %c0_2] : memref<128x16xbf16, #tpu.memory_space<vmem>>, vector<128x16xbf16>
    %cst = arith.constant dense<0.000000e+00> : vector<128x8xf32>
    %3 = tpu.matmul %2, %1, %cst {dimension_numbers = #tpu.dot_dimension_numbers<[1], [0], [0], [1], [0, 0, 1, 1], [], []>} : vector<128x16xbf16>, vector<16x8xbf16>, vector<128x8xf32> -> vector<128x8xf32>
    %c0_3 = arith.constant 0 : index
    %c0_4 = arith.constant 0 : index
    %4 = vector.load %arg4[%c0_3, %c0_4] : memref<128x2xf32, #tpu.memory_space<vmem>>, vector<128x1xf32>
    %5 = vector.broadcast %4 : vector<128x1xf32> to vector<128x8xf32>
    %6 = arith.addf %3, %5 : vector<128x8xf32>
    %cst_5 = arith.constant 0.000000e+00 : f32
    %7 = vector.broadcast %cst_5 : f32 to vector<128x8xf32>
    %8 = arith.maximumf %6, %7 : vector<128x8xf32>
    %c0_6 = arith.constant 0 : index
    %c0_7 = arith.constant 0 : index
    %9 = vector.load %arg3[%c0_6, %c0_7] : memref<8x128xbf16, #tpu.memory_space<vmem>>, vector<8x128xbf16>
    %10 = arith.truncf %8 : vector<128x8xf32> to vector<128x8xbf16>
    %cst_8 = arith.constant dense<0.000000e+00> : vector<8x8xf32>
    %11 = tpu.matmul %9, %10, %cst_8 {dimension_numbers = #tpu.dot_dimension_numbers<[1], [0], [0], [1], [0, 0, 1, 1], [], []>} : vector<8x128xbf16>, vector<128x8xbf16>, vector<8x8xf32> -> vector<8x8xf32>
    %c0_9 = arith.constant 0 : index
    %c1 = arith.constant 1 : index
    %12 = vector.load %arg4[%c0_9, %c1] : memref<128x2xf32, #tpu.memory_space<vmem>>, vector<8x1xf32>
    %13 = vector.broadcast %12 : vector<8x1xf32> to vector<8x8xf32>
    %14 = arith.addf %11, %13 : vector<8x8xf32>
    %c0_10 = arith.constant 0 : index
    %c0_11 = arith.constant 0 : index
    %15 = vector.load %arg5[%c0_10, %c0_11] : memref<8x8xf32, #tpu.memory_space<vmem>>, vector<8x8xf32>
    tpu.vector_store %arg5[%c0_10, %c0_11], %14 {strides = array<i32>} : memref<8x8xf32, #tpu.memory_space<vmem>>, vector<8x8xf32>,
    return
  }
  func.func @transform_0(%arg0: i32) -> (i32, i32) {
    %c0_i32 = arith.constant 0 : i32
    %c0_i32_0 = arith.constant 0 : i32
    return %c0_i32, %arg0 : i32, i32
  }
  func.func @transform_1(%arg0: i32) -> (i32, i32) {
    %c0_i32 = arith.constant 0 : i32
    %c0_i32_0 = arith.constant 0 : i32
    %c0_i32_1 = arith.constant 0 : i32
    return %c0_i32, %c0_i32_0 : i32, i32
  }
  func.func @transform_2(%arg0: i32) -> (i32, i32) {
    %c0_i32 = arith.constant 0 : i32
    %c0_i32_0 = arith.constant 0 : i32
    %c0_i32_1 = arith.constant 0 : i32
    return %c0_i32, %c0_i32_0 : i32, i32
  }
  func.func @transform_3(%arg0: i32) -> (i32, i32) {
    %c0_i32 = arith.constant 0 : i32
    %c0_i32_0 = arith.constant 0 : i32
    %c0_i32_1 = arith.constant 0 : i32
    return %c0_i32, %c0_i32_0 : i32, i32
  }
  func.func @transform_4(%arg0: i32) -> (i32, i32) {
    %c0_i32 = arith.constant 0 : i32
    %c0_i32_0 = arith.constant 0 : i32
    return %c0_i32, %arg0 : i32, i32
  }
}

</mosaic_0001>

<llo_original>
// kernel: tpu_custom_call.1
$region0: #{tpu_custom_call.1}
  #allocation0 [shape = 'u32[]', space=smem, size = 0x4, offset = 0x4, fixed_abs, tag = 'smem constant byte address 0x4 - core index']
  #allocation1 [shape = 'u32[144,128]{1,0:T(1,128)}', space=vmem, size = 0x12000, scoped, tag = 'internal scratch']
  %s0 = inlined_call_operand.vmem [shape: f32[16,8], index: 0, kind: input, shape index: {}]
  %s1 = inlined_call_operand.vmem [shape: bf16[128,16], index: 1, kind: input, shape index: {}]
  %s2 = inlined_call_operand.vmem [shape: bf16[8,128], index: 2, kind: input, shape index: {}]
  %s3 = inlined_call_operand.vmem [shape: f32[128,2], index: 3, kind: input, shape index: {}]
  %s4 = inlined_call_operand.hbm [shape: f32[8,8], index: 4, kind: output, shape index: {}]
  %s5 = sld [smem:[#allocation0]]
  $region26: #{tpu_custom_call.1} parent=0
    _
  %s7 = ssub.s32 1, %s5
  %s8 = scalar_select 0, %s7, %s5
  $region1: #{tpu_custom_call.1} parent=0
    #allocation2 [shape = 'u8[4096]{0}', space=vmem, size = 0x1000, scoped, tag = 'output window, operand 0, single buffered']
    #allocation3 [shape = 's32[1]{0}', space=sflag, size = 0x4, scoped, tag = 'scoped memory for tpu_custom_call.1']
    %9 = vsyncpa [#allocation3], 0
    // Predicated region
    $region2: #{tpu_custom_call.1} parent=1 // pred_check
      _
    $region3: #{tpu_custom_call.1} parent=1 // pred_check_branch
      %11 = sbr.rel (0) target = $region5
    $region4: #{tpu_custom_call.1} parent=1 // pred_region
      _
    $region5: #{tpu_custom_call.1} parent=1 // pred_fallthru
      _
    // Predicated region
    $region6: #{tpu_custom_call.1} parent=1 // pred_check
      _
    $region7: #{tpu_custom_call.1} parent=1 // pred_check_branch
      %13 = sbr.rel (0) target = $region9
    $region8: #{tpu_custom_call.1} parent=1 // pred_region
      _
    $region9: #{tpu_custom_call.1} parent=1 // pred_fallthru
      _
    // Predicated region
    $region10: #{tpu_custom_call.1} parent=1 // pred_check
      _
    $region11: #{tpu_custom_call.1} parent=1 // pred_check_branch
      %15 = sbr.rel (0) target = $region13
    $region12: #{tpu_custom_call.1} parent=1 // pred_region
      _
    $region13: #{tpu_custom_call.1} parent=1 // pred_fallthru
      _
    // Predicated region
    $region14: #{tpu_custom_call.1} parent=1 // pred_check
      _
    $region15: #{tpu_custom_call.1} parent=1 // pred_check_branch
      %17 = sbr.rel (0) target = $region17
    $region16: #{tpu_custom_call.1} parent=1 // pred_region
      _
    $region17: #{tpu_custom_call.1} parent=1 // pred_fallthru
      _
    %v19 = vld [vmem:[%s0] sm:$0xff]
    %v20 = vld [vmem:[%s0 + $0x8] sm:$0xff]
    %v21 = vpack.c.bf16 %v20, %v19
    %v22 = vld [vmem:[%s1] sm:$0xf]
    %v23 = vld [vmem:[%s1 + $0x4] sm:$0xf]
    %v24 = vld [vmem:[%s1 + $0x8] sm:$0xf]
    %v25 = vld [vmem:[%s1 + $0xc] sm:$0xf]
    %v26 = vld [vmem:[%s1 + $0x10] sm:$0xf]
    %v27 = vld [vmem:[%s1 + $0x14] sm:$0xf]
    %v28 = vld [vmem:[%s1 + $0x18] sm:$0xf]
    %v29 = vld [vmem:[%s1 + $0x1c] sm:$0xf]
    %v30 = vld [vmem:[%s1 + $0x20] sm:$0xf]
    %v31 = vld [vmem:[%s1 + $0x24] sm:$0xf]
    %v32 = vld [vmem:[%s1 + $0x28] sm:$0xf]
    %v33 = vld [vmem:[%s1 + $0x2c] sm:$0xf]
    %v34 = vld [vmem:[%s1 + $0x30] sm:$0xf]
    %v35 = vld [vmem:[%s1 + $0x34] sm:$0xf]
    %v36 = vld [vmem:[%s1 + $0x38] sm:$0xf]
    %v37 = vld [vmem:[%s1 + $0x3c] sm:$0xf]
    %v38 = vld [vmem:[%s3] sm:$0xff]
    %v39 = vld [vmem:[%s3 + $0x8] sm:$0xff]
    %v40 = vld [vmem:[%s3 + $0x10] sm:$0xff]
    %v41 = vld [vmem:[%s3 + $0x18] sm:$0xff]
    %v42 = vld [vmem:[%s3 + $0x20] sm:$0xff]
    %v43 = vld [vmem:[%s3 + $0x28] sm:$0xff]
    %v44 = vld [vmem:[%s3 + $0x30] sm:$0xff]
    %v45 = vld [vmem:[%s3 + $0x38] sm:$0xff]
    %v46 = vld [vmem:[%s3 + $0x40] sm:$0xff]
    %v47 = vld [vmem:[%s3 + $0x48] sm:$0xff]
    %v48 = vld [vmem:[%s3 + $0x50] sm:$0xff]
    %v49 = vld [vmem:[%s3 + $0x58] sm:$0xff]
    %v50 = vld [vmem:[%s3 + $0x60] sm:$0xff]
    %v51 = vld [vmem:[%s3 + $0x68] sm:$0xff]
    %v52 = vld [vmem:[%s3 + $0x70] sm:$0xff]
    %v53 = vld [vmem:[%s3 + $0x78] sm:$0xff]
    %55 = vset.pattern.permute.xlu0 0
    %56 = vperm.xlu0 %55, %v38
    %v57 = vpop.permute.xlu0 %56
    %60 = vset.pattern.permute.xlu0 0
    %61 = vperm.xlu0 %60, %v39
    %v62 = vpop.permute.xlu0 %61
    %65 = vset.pattern.permute.xlu0 0
    %66 = vperm.xlu0 %65, %v40
    %v67 = vpop.permute.xlu0 %66
    %70 = vset.pattern.permute.xlu0 0
    %71 = vperm.xlu0 %70, %v41
    %v72 = vpop.permute.xlu0 %71
    %75 = vset.pattern.permute.xlu0 0
    %76 = vperm.xlu0 %75, %v42
    %v77 = vpop.permute.xlu0 %76
    %80 = vset.pattern.permute.xlu0 0
    %81 = vperm.xlu0 %80, %v43
    %v82 = vpop.permute.xlu0 %81
    %85 = vset.pattern.permute.xlu0 0
    %86 = vperm.xlu0 %85, %v44
    %v87 = vpop.permute.xlu0 %86
    %90 = vset.pattern.permute.xlu0 0
    %91 = vperm.xlu0 %90, %v45
    %v92 = vpop.permute.xlu0 %91
    %95 = vset.pattern.permute.xlu0 0
    %96 = vperm.xlu0 %95, %v46
    %v97 = vpop.permute.xlu0 %96
    %100 = vset.pattern.permute.xlu0 0
    %101 = vperm.xlu0 %100, %v47
    %v102 = vpop.permute.xlu0 %101
    %105 = vset.pattern.permute.xlu0 0
    %106 = vperm.xlu0 %105, %v48
    %v107 = vpop.permute.xlu0 %106
    %110 = vset.pattern.permute.xlu0 0
    %111 = vperm.xlu0 %110, %v49
    %v112 = vpop.permute.xlu0 %111
    %115 = vset.pattern.permute.xlu0 0
    %116 = vperm.xlu0 %115, %v50
    %v117 = vpop.permute.xlu0 %116
    %120 = vset.pattern.permute.xlu0 0
    %121 = vperm.xlu0 %120, %v51
    %v122 = vpop.permute.xlu0 %121
    %125 = vset.pattern.permute.xlu0 0
    %126 = vperm.xlu0 %125, %v52
    %v127 = vpop.permute.xlu0 %126
    %130 = vset.pattern.permute.xlu0 0
    %131 = vperm.xlu0 %130, %v53
    %v132 = vpop.permute.xlu0 %131
    %v150 = vunpack.c.l.b16 %v22
    %v151 = vunpack.c.l.b16 %v23
    %v152 = vunpack.c.l.b16 %v24
    %v153 = vunpack.c.l.b16 %v25
    %v154 = vunpack.c.l.b16 %v26
    %v155 = vunpack.c.l.b16 %v27
    %v156 = vunpack.c.l.b16 %v28
    %v157 = vunpack.c.l.b16 %v29
    %v158 = vunpack.c.l.b16 %v30
    %v159 = vunpack.c.l.b16 %v31
    %v160 = vunpack.c.l.b16 %v32
    %v161 = vunpack.c.l.b16 %v33
    %v162 = vunpack.c.l.b16 %v34
    %v163 = vunpack.c.l.b16 %v35
    %v164 = vunpack.c.l.b16 %v36
    %v165 = vunpack.c.l.b16 %v37
    %v166 = vpack.c.b16 %v151, %v150
    %v167 = vpack.c.b16 %v153, %v152
    %v168 = vpack.c.b16 %v155, %v154
    %v169 = vpack.c.b16 %v157, %v156
    %v170 = vpack.c.b16 %v159, %v158
    %v171 = vpack.c.b16 %v161, %v160
    %v172 = vpack.c.b16 %v163, %v162
    %v173 = vpack.c.b16 %v165, %v164
    %vm174 = vcmask 130048
    %v176 = vsel %vm174, %v166, 0
    %v179 = vsel %vm174, %v167, 0
    %v182 = vsel %vm174, %v168, 0
    %v185 = vsel %vm174, %v169, 0
    %v188 = vsel %vm174, %v170, 0
    %v191 = vsel %vm174, %v171, 0
    %v194 = vsel %vm174, %v172, 0
    %v197 = vsel %vm174, %v173, 0
    %199 = vmatprep.subr.bf16.mxu0 0
    %200 = vmatpush1.bf16.msra.mxu0 0
    %201 = vmatprep.subr.bf16.mxu0 0
    %202 = vmatpush1.bf16.msra.mxu0 0
    %203 = vmatprep.subr.bf16.mxu0 0
    %204 = vmatpush1.bf16.msra.mxu0 0
    %205 = vmatprep.subr.bf16.mxu0 0
    %206 = vmatpush1.bf16.msra.mxu0 0
    %207 = vmatprep.subr.bf16.mxu0 0
    %208 = vmatpush1.bf16.msra.mxu0 0
    %209 = vmatprep.subr.bf16.mxu0 0
    %210 = vmatpush1.bf16.msra.mxu0 0
    %211 = vmatprep.subr.bf16.mxu0 0
    %212 = vmatpush1.bf16.msra.mxu0 0
    %213 = vmatprep.subr.bf16.mxu0 0
    %214 = vmatpush1.bf16.msra.mxu0 %v21
    %215 = vmatprep.subr.bf16.mxu0 0
    %216 = vmatpush2.bf16.msra.mxu0 0
    %217 = vmatprep.subr.bf16.mxu0 0
    %218 = vmatpush2.bf16.msra.mxu0 0
    %219 = vmatprep.subr.bf16.mxu0 0
    %220 = vmatpush2.bf16.msra.mxu0 0
    %221 = vmatprep.subr.bf16.mxu0 0
    %222 = vmatpush2.bf16.msra.mxu0 0
    %223 = vmatprep.subr.bf16.mxu0 0
    %224 = vmatpush2.bf16.msra.mxu0 0
    %225 = vmatprep.subr.bf16.mxu0 0
    %226 = vmatpush2.bf16.msra.mxu0 0
    %227 = vmatprep.subr.bf16.mxu0 0
    %228 = vmatpush2.bf16.msra.mxu0 0
    %229 = vmatprep.subr.bf16.mxu0 0
    %230 = vmatpush2.bf16.msra.mxu0 0
    %231 = vmatprep.mubr.bf16.mxu0 0
    %232 = vmatmul.mubr.bf16.gmra.mxu0 %v176
    %v233 = vpop.f32.mrf.mxu0
    %v234 = vadd.f32 %v57, %v233
    %v235 = vpop.f32.mrf.mxu0
    %v236 = vpop.f32.mrf.mxu0
    %v237 = vadd.f32 %v62, %v236
    %v238 = vpop.f32.mrf.mxu0
    %239 = vmatprep.mubr.bf16.mxu0 0
    %240 = vmatmul.mubr.bf16.gmra.mxu0 %v179
    %v241 = vpop.f32.mrf.mxu0
    %v242 = vadd.f32 %v67, %v241
    %v243 = vpop.f32.mrf.mxu0
    %v244 = vpop.f32.mrf.mxu0
    %v245 = vadd.f32 %v72, %v244
    %v246 = vpop.f32.mrf.mxu0
    %247 = vmatprep.mubr.bf16.mxu0 0
    %248 = vmatmul.mubr.bf16.gmra.mxu0 %v182
    %v249 = vpop.f32.mrf.mxu0
    %v250 = vadd.f32 %v77, %v249
    %v251 = vpop.f32.mrf.mxu0
    %v252 = vpop.f32.mrf.mxu0
    %v253 = vadd.f32 %v82, %v252
    %v254 = vpop.f32.mrf.mxu0
    %255 = vmatprep.mubr.bf16.mxu0 0
    %256 = vmatmul.mubr.bf16.gmra.mxu0 %v185
    %v257 = vpop.f32.mrf.mxu0
    %v258 = vadd.f32 %v87, %v257
    %v259 = vpop.f32.mrf.mxu0
    %v260 = vpop.f32.mrf.mxu0
    %v261 = vadd.f32 %v92, %v260
    %v262 = vpop.f32.mrf.mxu0
    %263 = vmatprep.mubr.bf16.mxu0 0
    %264 = vmatmul.mubr.bf16.gmra.mxu0 %v188
    %v265 = vpop.f32.mrf.mxu0
    %v266 = vadd.f32 %v97, %v265
    %v267 = vpop.f32.mrf.mxu0
    %v268 = vpop.f32.mrf.mxu0
    %v269 = vadd.f32 %v102, %v268
    %v270 = vpop.f32.mrf.mxu0
    %271 = vmatprep.mubr.bf16.mxu0 0
    %272 = vmatmul.mubr.bf16.gmra.mxu0 %v191
    %v273 = vpop.f32.mrf.mxu0
    %v274 = vadd.f32 %v107, %v273
    %v275 = vpop.f32.mrf.mxu0
    %v276 = vpop.f32.mrf.mxu0
    %v277 = vadd.f32 %v112, %v276
    %v278 = vpop.f32.mrf.mxu0
    %279 = vmatprep.mubr.bf16.mxu0 0
    %280 = vmatmul.mubr.bf16.gmra.mxu0 %v194
    %v281 = vpop.f32.mrf.mxu0
    %v282 = vadd.f32 %v117, %v281
    %v283 = vpop.f32.mrf.mxu0
    %v284 = vpop.f32.mrf.mxu0
    %v285 = vadd.f32 %v122, %v284
    %v286 = vpop.f32.mrf.mxu0
    %287 = vmatprep.mubr.bf16.mxu0 0
    %288 = vmatmul.mubr.bf16.gmra.mxu0 %v197
    %v289 = vpop.f32.mrf.mxu0
    %v290 = vadd.f32 %v127, %v289
    %v291 = vpop.f32.mrf.mxu0
    %v292 = vpop.f32.mrf.mxu0
    %v293 = vadd.f32 %v132, %v292
    %v294 = vpop.f32.mrf.mxu0
    %295 = vdwg.mxu0
    %v296 = vmax.f32 %v234, 0.0
    %v297 = vmax.f32 %v237, 0.0
    %v298 = vmax.f32 %v242, 0.0
    %v299 = vmax.f32 %v245, 0.0
    %v300 = vmax.f32 %v250, 0.0
    %v301 = vmax.f32 %v253, 0.0
    %v302 = vmax.f32 %v258, 0.0
    %v303 = vmax.f32 %v261, 0.0
    %v304 = vmax.f32 %v266, 0.0
    %v305 = vmax.f32 %v269, 0.0
    %v306 = vmax.f32 %v274, 0.0
    %v307 = vmax.f32 %v277, 0.0
    %v308 = vmax.f32 %v282, 0.0
    %v309 = vmax.f32 %v285, 0.0
    %v310 = vmax.f32 %v290, 0.0
    %v311 = vmax.f32 %v293, 0.0
    %v312 = vld [vmem:[%s2] sm:$0xf]
    %v313 = vpack.c.bf16 %v297, %v296
    %v314 = vpack.c.bf16 %v299, %v298
    %v315 = vpack.c.bf16 %v301, %v300
    %v316 = vpack.c.bf16 %v303, %v302
    %v317 = vpack.c.bf16 %v305, %v304
    %v318 = vpack.c.bf16 %v307, %v306
    %v319 = vpack.c.bf16 %v309, %v308
    %v320 = vpack.c.bf16 %v311, %v310
    %v321 = vld [vmem:[%s3] sm:$0xff]
    %323 = vset.pattern.permute.xlu0 1
    %324 = vperm.xlu0 %323, %v321
    %v325 = vpop.permute.xlu0 %324
    %327 = vmatprep.subr.bf16.mxu0 0
    %328 = vmatpush1.bf16.msra.mxu0 %v320
    %329 = vmatprep.subr.bf16.mxu0 0
    %330 = vmatpush1.bf16.msra.mxu0 %v319
    %331 = vmatprep.subr.bf16.mxu0 0
    %332 = vmatpush1.bf16.msra.mxu0 %v318
    %333 = vmatprep.subr.bf16.mxu0 0
    %334 = vmatpush1.bf16.msra.mxu0 %v317
    %335 = vmatprep.subr.bf16.mxu0 0
    %336 = vmatpush1.bf16.msra.mxu0 %v316
    %337 = vmatprep.subr.bf16.mxu0 0
    %338 = vmatpush1.bf16.msra.mxu0 %v315
    %339 = vmatprep.subr.bf16.mxu0 0
    %340 = vmatpush1.bf16.msra.mxu0 %v314
    %341 = vmatprep.subr.bf16.mxu0 0
    %342 = vmatpush1.bf16.msra.mxu0 %v313
    %343 = vmatprep.subr.bf16.mxu0 0
    %344 = vmatpush2.bf16.msra.mxu0 0
    %345 = vmatprep.subr.bf16.mxu0 0
    %346 = vmatpush2.bf16.msra.mxu0 0
    %347 = vmatprep.subr.bf16.mxu0 0
    %348 = vmatpush2.bf16.msra.mxu0 0
    %349 = vmatprep.subr.bf16.mxu0 0
    %350 = vmatpush2.bf16.msra.mxu0 0
    %351 = vmatprep.subr.bf16.mxu0 0
    %352 = vmatpush2.bf16.msra.mxu0 0
    %353 = vmatprep.subr.bf16.mxu0 0
    %354 = vmatpush2.bf16.msra.mxu0 0
    %355 = vmatprep.subr.bf16.mxu0 0
    %356 = vmatpush2.bf16.msra.mxu0 0
    %357 = vmatprep.subr.bf16.mxu0 0
    %358 = vmatpush2.bf16.msra.mxu0 0
    %359 = vmatprep.mubr.bf16.mxu0 0
    %360 = vmatmul.mubr.bf16.gmra.mxu0 %v312
    %v361 = vpop.f32.mrf.mxu0
    %v362 = vadd.f32 %v325, %v361
    %v363 = vpop.f32.mrf.mxu0
    %v364 = vpop.f32.mrf.mxu0
    %v365 = vpop.f32.mrf.mxu0
    %366 = vdwg.mxu0
    %vm367 = vcmask 64512
    %368 = vst.msk [vmem:[#allocation2] sm:$0xff] %vm367, %v362
    // Predicated region
    $region18: #{tpu_custom_call.1} parent=1 // pred_check
      _
    $region19: #{tpu_custom_call.1} parent=1 // pred_check_branch
      %370 = sbr.rel (0) target = $region21
    $region20: #{tpu_custom_call.1} parent=1 // pred_region
      %s372 = ssub.s32 128, 128
      %373 = vsyncadd [#allocation3], %s372
      %s375 = sshll.u32 [#allocation2], 4
      %s376 = int_to_ptr.vmem [resolvable:$true] %s375
      %378 = dma.vmem_to_hbm [thread:$0]  %s376, 128, %s4, [#allocation3]
    $region21: #{tpu_custom_call.1} parent=1 // pred_fallthru
      _
    // Predicated region
    $region22: #{tpu_custom_call.1} parent=1 // pred_check
      _
    $region23: #{tpu_custom_call.1} parent=1 // pred_check_branch
      %380 = sbr.rel (0) target = $region25
    $region24: #{tpu_custom_call.1} parent=1 // pred_region
      %381 = dma.done [#allocation3], 128
    $region25: #{tpu_custom_call.1} parent=1 // pred_fallthru
      _
    %382 = vsyncpa [#allocation3], 1

</llo_original>
